<compile_context>
chip_gen: v7x
topology: tpu7x:2x2x1
jax: 0.10.0
libtpu: 0.0.40
codegen_flags: <defaults>
</compile_context>

<pallas_src>
import math

import jax
import jax.numpy as jnp
from jax.experimental import pallas as pl
from jax.experimental.pallas import tpu as pltpu


def _round_up(x, m):
    return (x + m - 1) // m * m


def _pick_tile(request, n, max_waste=0.25):
    """Largest power-of-two multiple of 128 <= request whose padding of the
    node dimension stays within ~max_waste of n (bounds padded adj work)."""
    limit = max(_round_up(n, 128), int(n * (1.0 + max_waste)))
    t, best = 128, 128
    while t * 2 <= request:
        t *= 2
        if _round_up(n, t) <= limit:
            best = t
    return best


def _cast_pad_2d(a, rows, cols, dtype):
    a = a.astype(dtype)
    pr, pc = rows - a.shape[0], cols - a.shape[1]
    if pr or pc:
        a = jnp.pad(a, ((0, pr), (0, pc)))
    return a


def _support_kernel(x_ref, w_ref, s_ref):
    # support tile = X_tile @ W   (MXU, f32 accumulate), stored in compute dtype.
    s_ref[...] = jnp.dot(
        x_ref[...], w_ref[...], preferred_element_type=jnp.float32
    ).astype(s_ref.dtype)


def _make_aggregate_kernel(k_tile, support_resident):
    def kernel(adj_ref, s_ref, b_ref, o_ref, acc_ref):
        k = pl.program_id(1)

        @pl.when(k == 0)
        def _init():
            acc_ref[...] = jnp.zeros_like(acc_ref)

        if support_resident:
            # support lives fully in VMEM (constant index_map -> DMA'd once);
            # slice the k-th row band out of the resident slab.
            off = pl.multiple_of(k * k_tile, k_tile)
            s_blk = s_ref[pl.ds(off, k_tile), :]
        else:
            s_blk = s_ref[...]

        acc_ref[...] += jnp.dot(
            adj_ref[...], s_blk, preferred_element_type=jnp.float32
        )

        @pl.when(k == pl.num_programs(1) - 1)
        def _finalize():
            # Bias add rides the VPU while the MXU dominates -> effectively free.
            o_ref[...] = (acc_ref[...] + b_ref[...].astype(jnp.float32)).astype(
                o_ref.dtype)

    return kernel


def gcn_layer(x, weight, adj, bias=None, *, compute_dtype=jnp.bfloat16,
              out_dtype=None, row_tile=512, k_tile=512, stage1_row_tile=1024):
    """GCN layer forward: adj @ (x @ weight) + bias.

    x: (N, F_in), weight: (F_in, F_out), adj: (N, N) dense, bias: (F_out,)|None.
    row_tile / k_tile: stage-2 (output-row / adjacency-column) tiles.
    stage1_row_tile: stage-1 row tile.  All requests should be power-of-two
    multiples of 128; they are auto-clamped for small graphs.
    out_dtype: output dtype; defaults to compute_dtype (halves writeback bytes).
    """
    N, f_in = x.shape
    f_out = weight.shape[1]
    out_dtype = compute_dtype if out_dtype is None else out_dtype

    # Lane-dense / tile-aligned padding (zeros are exact for matmul).
    f_in_p = _round_up(f_in, 128)
    f_out_p = _round_up(f_out, 128)

    rt1 = _pick_tile(stage1_row_tile, N)   # stage-1 row tile
    rt2 = _pick_tile(row_tile, N)          # stage-2 output-row tile
    kt2 = _pick_tile(k_tile, N)            # stage-2 contraction tile
    max_tile = max(rt1, rt2, kt2)
    n_p = _round_up(N, max_tile)           # all tiles (pow2*128) divide n_p
    n1_blocks = n_p // rt1
    n_row_blocks = n_p // rt2
    n_k_blocks = n_p // kt2

    cdt_size = jnp.dtype(compute_dtype).itemsize
    out_size = jnp.dtype(out_dtype).itemsize

    # Cast + pad only when needed (no zeros().at[].set() round-trip through HBM).
    x_p = _cast_pad_2d(x, n_p, f_in_p, compute_dtype)
    w_p = _cast_pad_2d(weight, f_in_p, f_out_p, compute_dtype)
    adj_p = _cast_pad_2d(adj, n_p, n_p, compute_dtype)
    if bias is None:
        b_p = jnp.zeros((1, f_out_p), jnp.float32)
    else:
        b_p = _cast_pad_2d(bias[None, :], 1, f_out_p, jnp.float32)

    # --- Stage 1: support = X @ W (computed once; W stays resident in VMEM). ---
    support = pl.pallas_call(
        _support_kernel,
        out_shape=jax.ShapeDtypeStruct((n_p, f_out_p), compute_dtype),
        grid_spec=pltpu.PrefetchScalarGridSpec(
            num_scalar_prefetch=0,
            grid=(n1_blocks,),
            in_specs=[
                pl.BlockSpec((rt1, f_in_p), lambda i: (i, 0)),
                pl.BlockSpec((f_in_p, f_out_p), lambda i: (0, 0)),
            ],
            out_specs=pl.BlockSpec((rt1, f_out_p), lambda i: (i, 0)),
        ),
        compiler_params=pltpu.CompilerParams(
            dimension_semantics=("parallel",),
            vmem_limit_bytes=min(
                max(2 * rt1 * (f_in_p + f_out_p) * cdt_size
                    + 2 * f_in_p * f_out_p * cdt_size + (4 << 20), 32 << 20),
                48 << 20),
        ),
        cost_estimate=pl.CostEstimate(
            flops=2 * n_p * f_in_p * f_out_p,
            transcendentals=0,
            bytes_accessed=(n_p * f_in_p + f_in_p * f_out_p
                            + n_p * f_out_p) * cdt_size,
        ),
    )(x_p, w_p)

    # --- Stage 2: out = adj @ support + bias (tiled grid, f32 accumulator). ---
    # Keep `support` resident in VMEM when it fits the cross-gen budget
    # (budget assumes double-buffered allocation; 40 MiB keeps v7x safe).
    support_bytes = n_p * f_out_p * cdt_size
    adj_tile_bytes = 2 * rt2 * kt2 * cdt_size
    out_tile_bytes = 2 * rt2 * f_out_p * out_size
    acc_bytes = rt2 * f_out_p * 4
    misc_bytes = 2 * f_out_p * 4 + (1 << 20)
    support_resident = (2 * support_bytes + adj_tile_bytes + out_tile_bytes
                        + acc_bytes + misc_bytes) <= (40 << 20)

    if support_resident:
        support_spec = pl.BlockSpec((n_p, f_out_p), lambda i, k: (0, 0))
        support_buf_bytes = 2 * support_bytes
    else:
        support_spec = pl.BlockSpec((kt2, f_out_p), lambda i, k: (k, 0))
        support_buf_bytes = 2 * kt2 * f_out_p * cdt_size

    stage2_vmem = (support_buf_bytes + adj_tile_bytes + out_tile_bytes
                   + acc_bytes + misc_bytes)
    stage2_limit = min(max(stage2_vmem + (4 << 20), 32 << 20), 48 << 20)

    support_reads = 1 if support_resident else n_row_blocks
    out_p = pl.pallas_call(
        _make_aggregate_kernel(kt2, support_resident),
        out_shape=jax.ShapeDtypeStruct((n_p, f_out_p), out_dtype),
        grid_spec=pltpu.PrefetchScalarGridSpec(
            num_scalar_prefetch=0,
            grid=(n_row_blocks, n_k_blocks),
            in_specs=[
                pl.BlockSpec((rt2, kt2), lambda i, k: (i, k)),
                support_spec,
                pl.BlockSpec((1, f_out_p), lambda i, k: (0, 0)),
            ],
            out_specs=pl.BlockSpec((rt2, f_out_p), lambda i, k: (i, 0)),
            scratch_shapes=[pltpu.VMEM((rt2, f_out_p), jnp.float32)],
        ),
        compiler_params=pltpu.CompilerParams(
            dimension_semantics=("parallel", "arbitrary"),
            vmem_limit_bytes=stage2_limit,
        ),
        cost_estimate=pl.CostEstimate(
            flops=2 * n_p * n_p * f_out_p,
            transcendentals=0,
            bytes_accessed=(n_p * n_p * cdt_size
                            + support_reads * n_p * f_out_p * cdt_size
                            + n_p * f_out_p * out_size
                            + f_out_p * 4),
        ),
    )(adj_p, support, b_p)

    # Padded rows of out_p contain only the bias; slice before returning.
    return out_p[:N, :f_out]


if __name__ == "__main__":
    key = jax.random.PRNGKey(0)
    k_x, k_adj, k_w, k_b = jax.random.split(key, 4)

    # Small shapes consistent with the module's forward.
    N = 256
    in_features = 32
    out_features = 16

    # Deterministic parameter init matching reset_parameters():
    # uniform(-stdv, stdv), stdv = 1/sqrt(out_features)
    stdv = 1.0 / math.sqrt(out_features)
    weight = jax.random.uniform(
        k_w, (in_features, out_features), jnp.float32, minval=-stdv, maxval=stdv)
    bias = jax.random.uniform(
        k_b, (out_features,), jnp.float32, minval=-stdv, maxval=stdv)

    # Example inputs: node features and a (dense) row-normalized adjacency.
    x = jax.random.normal(k_x, (N, in_features), jnp.float32)
    adj = (jax.random.uniform(k_adj, (N, N)) < 0.1).astype(jnp.float32)
    adj = adj + jnp.eye(N, dtype=jnp.float32)          # self-loops
    adj = adj / jnp.sum(adj, axis=1, keepdims=True)    # row-normalize

    gcn = jax.jit(gcn_layer)
    out = gcn(x, weight, adj, bias)
    jax.block_until_ready(out)
    assert out.shape == (N, out_features)

    # Reference 1: mirror the kernel's dtype flow (bf16 operands, f32 accumulate).
    xb = x.astype(jnp.bfloat16)
    wb = weight.astype(jnp.bfloat16)
    ab = adj.astype(jnp.bfloat16)
    sup_ref = jnp.dot(xb, wb, preferred_element_type=jnp.float32).astype(jnp.bfloat16)
    ref_bf16 = jnp.dot(ab, sup_ref, preferred_element_type=jnp.float32) + bias[None, :]
    assert jnp.allclose(out.astype(jnp.float32), ref_bf16, atol=1e-2, rtol=1e-2), \
        "mismatch vs bf16-flow reference"

    # Reference 2: full-precision torch semantics (loose tolerance for bf16 inputs).
    ref_f32 = adj @ (x @ weight) + bias[None, :]
    assert jnp.allclose(out.astype(jnp.float32), ref_f32, atol=5e-2, rtol=5e-2), \
        "mismatch vs f32 reference"

    print("KERNEL_OK")
</pallas_src>

<mosaic_0001>
module attributes {stable_mosaic.version = 11 : i64} {
  func.func @_support_kernel(%arg0: i32, %arg1: memref<256x128xbf16, #tpu.memory_space<vmem>>, %arg2: memref<128x128xbf16, #tpu.memory_space<vmem>>, %arg3: memref<256x128xbf16, #tpu.memory_space<vmem>>) attributes {dimension_semantics = [#tpu.dimension_semantics<parallel>], iteration_bounds = array<i64: 1>, scalar_prefetch = 0 : i64, scratch_operands = 0 : i64, tpu.core_type = #tpu.core_type<tc>, window_params = [{transform_indices = @transform_0, window_bounds = array<i64: 256, 128>}, {pipeline_mode = #tpu.pipeline_mode<synchronous>, transform_indices = @transform_1, window_bounds = array<i64: 128, 128>}, {transform_indices = @transform_2, window_bounds = array<i64: 256, 128>}]} {
    %c0 = arith.constant 0 : index
    %c0_0 = arith.constant 0 : index
    %0 = vector.load %arg1[%c0, %c0_0] : memref<256x128xbf16, #tpu.memory_space<vmem>>, vector<256x128xbf16>
    %c0_1 = arith.constant 0 : index
    %c0_2 = arith.constant 0 : index
    %1 = vector.load %arg2[%c0_1, %c0_2] : memref<128x128xbf16, #tpu.memory_space<vmem>>, vector<128x128xbf16>
    %cst = arith.constant dense<0.000000e+00> : vector<256x128xf32>
    %2 = tpu.matmul %0, %1, %cst {dimension_numbers = #tpu.dot_dimension_numbers<[1], [0], [0], [1], [0, 0, 1, 1], [], []>} : vector<256x128xbf16>, vector<128x128xbf16>, vector<256x128xf32> -> vector<256x128xf32>
    %3 = arith.truncf %2 : vector<256x128xf32> to vector<256x128xbf16>
    %c0_3 = arith.constant 0 : index
    %c0_4 = arith.constant 0 : index
    %4 = vector.load %arg3[%c0_3, %c0_4] : memref<256x128xbf16, #tpu.memory_space<vmem>>, vector<256x128xbf16>
    tpu.vector_store %arg3[%c0_3, %c0_4], %3 {strides = array<i32>} : memref<256x128xbf16, #tpu.memory_space<vmem>>, vector<256x128xbf16>,
    return
  }
  func.func @transform_0(%arg0: i32) -> (i32, i32) {
    %c0_i32 = arith.constant 0 : i32
    %c0_i32_0 = arith.constant 0 : i32
    return %arg0, %c0_i32 : i32, i32
  }
  func.func @transform_1(%arg0: i32) -> (i32, i32) {
    %c0_i32 = arith.constant 0 : i32
    %c0_i32_0 = arith.constant 0 : i32
    %c0_i32_1 = arith.constant 0 : i32
    return %c0_i32, %c0_i32_0 : i32, i32
  }
  func.func @transform_2(%arg0: i32) -> (i32, i32) {
    %c0_i32 = arith.constant 0 : i32
    %c0_i32_0 = arith.constant 0 : i32
    return %arg0, %c0_i32 : i32, i32
  }
}

module attributes {stable_mosaic.version = 11 : i64} {
  func.func @kernel(%arg0: i32, %arg1: i32, %arg2: memref<256x256xbf16, #tpu.memory_space<vmem>>, %arg3: memref<256x128xbf16, #tpu.memory_space<vmem>>, %arg4: memref<1x128xf32, #tpu.memory_space<vmem>>, %arg5: memref<256x128xbf16, #tpu.memory_space<vmem>>, %arg6: memref<256x128xf32, #tpu.memory_space<vmem>>) attributes {dimension_semantics = [#tpu.dimension_semantics<parallel>, #tpu.dimension_semantics<arbitrary>], iteration_bounds = array<i64: 1, 1>, scalar_prefetch = 0 : i64, scratch_operands = 1 : i64, tpu.core_type = #tpu.core_type<tc>, window_params = [{transform_indices = @transform_0, window_bounds = array<i64: 256, 256>}, {pipeline_mode = #tpu.pipeline_mode<synchronous>, transform_indices = @transform_1, window_bounds = array<i64: 256, 128>}, {pipeline_mode = #tpu.pipeline_mode<synchronous>, transform_indices = @transform_2, window_bounds = array<i64: 1, 128>}, {transform_indices = @transform_3, window_bounds = array<i64: 256, 128>}]} {
    %c0_i32 = arith.constant 0 : i32
    %0 = arith.cmpi eq, %arg1, %c0_i32 : i32
    %1 = arith.extui %0 : i1 to i32
    %c0_i32_0 = arith.constant 0 : i32
    %2 = arith.cmpi ne, %1, %c0_i32_0 : i32
    scf.if %2 {
      %cst_9 = arith.constant 0.000000e+00 : f32
      %15 = vector.broadcast %cst_9 : f32 to vector<256x128xf32>
      %c0_10 = arith.constant 0 : index
      %c0_11 = arith.constant 0 : index
      %16 = vector.load %arg6[%c0_10, %c0_11] : memref<256x128xf32, #tpu.memory_space<vmem>>, vector<256x128xf32>
      tpu.vector_store %arg6[%c0_10, %c0_11], %15 {strides = array<i32>} : memref<256x128xf32, #tpu.memory_space<vmem>>, vector<256x128xf32>,
    } else {
    }
    %c256_i32 = arith.constant 256 : i32
    %3 = arith.muli %arg1, %c256_i32 : i32
    %4 = tpu.assume_multiple %3, 256 : i32
    %5 = arith.index_cast %4 : i32 to index
    %c0 = arith.constant 0 : index
    %6 = vector.load %arg3[%5, %c0] : memref<256x128xbf16, #tpu.memory_space<vmem>>, vector<256x128xbf16>
    %c0_1 = arith.constant 0 : index
    %c0_2 = arith.constant 0 : index
    %7 = vector.load %arg6[%c0_1, %c0_2] : memref<256x128xf32, #tpu.memory_space<vmem>>, vector<256x128xf32>
    %c0_3 = arith.constant 0 : index
    %c0_4 = arith.constant 0 : index
    %8 = vector.load %arg2[%c0_3, %c0_4] : memref<256x256xbf16, #tpu.memory_space<vmem>>, vector<256x256xbf16>
    %cst = arith.constant dense<0.000000e+00> : vector<256x128xf32>
    %9 = tpu.matmul %8, %6, %cst {dimension_numbers = #tpu.dot_dimension_numbers<[1], [0], [0], [1], [0, 0, 1, 1], [], []>} : vector<256x256xbf16>, vector<256x128xbf16>, vector<256x128xf32> -> vector<256x128xf32>
    %10 = arith.addf %7, %9 : vector<256x128xf32>
    %c0_5 = arith.constant 0 : index
    %c0_6 = arith.constant 0 : index
    %11 = vector.load %arg6[%c0_5, %c0_6] : memref<256x128xf32, #tpu.memory_space<vmem>>, vector<256x128xf32>
    tpu.vector_store %arg6[%c0_5, %c0_6], %10 {strides = array<i32>} : memref<256x128xf32, #tpu.memory_space<vmem>>, vector<256x128xf32>,
    %c0_i32_7 = arith.constant 0 : i32
    %12 = arith.cmpi eq, %arg1, %c0_i32_7 : i32
    %13 = arith.extui %12 : i1 to i32
    %c0_i32_8 = arith.constant 0 : i32
    %14 = arith.cmpi ne, %13, %c0_i32_8 : i32
    scf.if %14 {
      %c0_9 = arith.constant 0 : index
      %c0_10 = arith.constant 0 : index
      %15 = vector.load %arg6[%c0_9, %c0_10] : memref<256x128xf32, #tpu.memory_space<vmem>>, vector<256x128xf32>
      %c0_11 = arith.constant 0 : index
      %c0_12 = arith.constant 0 : index
      %16 = vector.load %arg4[%c0_11, %c0_12] : memref<1x128xf32, #tpu.memory_space<vmem>>, vector<1x128xf32>
      %17 = vector.broadcast %16 : vector<1x128xf32> to vector<256x128xf32>
      %18 = arith.addf %15, %17 : vector<256x128xf32>
      %19 = arith.truncf %18 : vector<256x128xf32> to vector<256x128xbf16>
      %c0_13 = arith.constant 0 : index
      %c0_14 = arith.constant 0 : index
      %20 = vector.load %arg5[%c0_13, %c0_14] : memref<256x128xbf16, #tpu.memory_space<vmem>>, vector<256x128xbf16>
      tpu.vector_store %arg5[%c0_13, %c0_14], %19 {strides = array<i32>} : memref<256x128xbf16, #tpu.memory_space<vmem>>, vector<256x128xbf16>,
    } else {
    }
    return
  }
  func.func @transform_0(%arg0: i32, %arg1: i32) -> (i32, i32) {
    %c0_i32 = arith.constant 0 : i32
    return %arg0, %arg1 : i32, i32
  }
  func.func @transform_1(%arg0: i32, %arg1: i32) -> (i32, i32) {
    %c0_i32 = arith.constant 0 : i32
    %c0_i32_0 = arith.constant 0 : i32
    %c0_i32_1 = arith.constant 0 : i32
    return %c0_i32, %c0_i32_0 : i32, i32
  }
  func.func @transform_2(%arg0: i32, %arg1: i32) -> (i32, i32) {
    %c0_i32 = arith.constant 0 : i32
    %c0_i32_0 = arith.constant 0 : i32
    %c0_i32_1 = arith.constant 0 : i32
    return %c0_i32, %c0_i32_0 : i32, i32
  }
  func.func @transform_3(%arg0: i32, %arg1: i32) -> (i32, i32) {
    %c0_i32 = arith.constant 0 : i32
    %c0_i32_0 = arith.constant 0 : i32
    return %arg0, %c0_i32 : i32, i32
  }
}

</mosaic_0001>

<llo_original>
// kernel: gcn_layer.2
$region0: #{gcn_layer.2}
  #allocation0 [shape = 'u32[]', space=smem, size = 0x4, offset = 0x4, fixed_abs, tag = 'smem constant byte address 0x4 - core index']
  #allocation1 [shape = 'u32[144,128]{1,0:T(1,128)}', space=vmem, size = 0x12000, scoped, tag = 'internal scratch']
  %s0 = inlined_call_operand.vmem [shape: bf16[256,128], index: 0, kind: input, shape index: {}]
  %s1 = inlined_call_operand.vmem [shape: bf16[128,128], index: 1, kind: input, shape index: {}]
  %s2 = inlined_call_operand.vmem [shape: bf16[256,128], index: 2, kind: output, shape index: {}]
  %s3 = sld [smem:[#allocation0]]
  $region18: #{gcn_layer.2} parent=0
    _
  %s5 = ssub.s32 1, %s3
  %s6 = scalar_select 0, %s5, %s3
  // Predicated region
  $region2: #{gcn_layer.2} parent=0 // pred_check
    _
  $region3: #{gcn_layer.2} parent=0 // pred_check_branch
    %8 = sbr.rel (0) target = $region5
  $region4: #{gcn_layer.2} parent=0 // pred_region
    _
  $region5: #{gcn_layer.2} parent=0 // pred_fallthru
    _
  // Predicated region
  $region6: #{gcn_layer.2} parent=0 // pred_check
    _
  $region7: #{gcn_layer.2} parent=0 // pred_check_branch
    %10 = sbr.rel (0) target = $region9
  $region8: #{gcn_layer.2} parent=0 // pred_region
    _
  $region9: #{gcn_layer.2} parent=0 // pred_fallthru
    _
  %v12 = vld [vmem:[%s0] sm:$0xf]
  %v13 = vld [vmem:[%s0 + $0x4] sm:$0xf]
  %v14 = vld [vmem:[%s0 + $0x8] sm:$0xf]
  %v15 = vld [vmem:[%s0 + $0xc] sm:$0xf]
  %v16 = vld [vmem:[%s0 + $0x10] sm:$0xf]
  %v17 = vld [vmem:[%s0 + $0x14] sm:$0xf]
  %v18 = vld [vmem:[%s0 + $0x18] sm:$0xf]
  %v19 = vld [vmem:[%s0 + $0x1c] sm:$0xf]
  %v20 = vld [vmem:[%s0 + $0x20] sm:$0xf]
  %v21 = vld [vmem:[%s0 + $0x24] sm:$0xf]
  %v22 = vld [vmem:[%s0 + $0x28] sm:$0xf]
  %v23 = vld [vmem:[%s0 + $0x2c] sm:$0xf]
  %v24 = vld [vmem:[%s0 + $0x30] sm:$0xf]
  %v25 = vld [vmem:[%s0 + $0x34] sm:$0xf]
  %v26 = vld [vmem:[%s0 + $0x38] sm:$0xf]
  %v27 = vld [vmem:[%s0 + $0x3c] sm:$0xf]
  %v28 = vld [vmem:[%s0 + $0x40] sm:$0xf]
  %v29 = vld [vmem:[%s0 + $0x44] sm:$0xf]
  %v30 = vld [vmem:[%s0 + $0x48] sm:$0xf]
  %v31 = vld [vmem:[%s0 + $0x4c] sm:$0xf]
  %v32 = vld [vmem:[%s0 + $0x50] sm:$0xf]
  %v33 = vld [vmem:[%s0 + $0x54] sm:$0xf]
  %v34 = vld [vmem:[%s0 + $0x58] sm:$0xf]
  %v35 = vld [vmem:[%s0 + $0x5c] sm:$0xf]
  %v36 = vld [vmem:[%s0 + $0x60] sm:$0xf]
  %v37 = vld [vmem:[%s0 + $0x64] sm:$0xf]
  %v38 = vld [vmem:[%s0 + $0x68] sm:$0xf]
  %v39 = vld [vmem:[%s0 + $0x6c] sm:$0xf]
  %v40 = vld [vmem:[%s0 + $0x70] sm:$0xf]
  %v41 = vld [vmem:[%s0 + $0x74] sm:$0xf]
  %v42 = vld [vmem:[%s0 + $0x78] sm:$0xf]
  %v43 = vld [vmem:[%s0 + $0x7c] sm:$0xf]
  %v44 = vld [vmem:[%s1] sm:$0xf]
  %v45 = vld [vmem:[%s1 + $0x4] sm:$0xf]
  %v46 = vld [vmem:[%s1 + $0x8] sm:$0xf]
  %v47 = vld [vmem:[%s1 + $0xc] sm:$0xf]
  %v48 = vld [vmem:[%s1 + $0x10] sm:$0xf]
  %v49 = vld [vmem:[%s1 + $0x14] sm:$0xf]
  %v50 = vld [vmem:[%s1 + $0x18] sm:$0xf]
  %v51 = vld [vmem:[%s1 + $0x1c] sm:$0xf]
  %v52 = vld [vmem:[%s1 + $0x20] sm:$0xf]
  %v53 = vld [vmem:[%s1 + $0x24] sm:$0xf]
  %v54 = vld [vmem:[%s1 + $0x28] sm:$0xf]
  %v55 = vld [vmem:[%s1 + $0x2c] sm:$0xf]
  %v56 = vld [vmem:[%s1 + $0x30] sm:$0xf]
  %v57 = vld [vmem:[%s1 + $0x34] sm:$0xf]
  %v58 = vld [vmem:[%s1 + $0x38] sm:$0xf]
  %v59 = vld [vmem:[%s1 + $0x3c] sm:$0xf]
  %v92 = vunpack.c.l.b16 %v12
  %v93 = vunpack.c.l.b16 %v13
  %v94 = vunpack.c.l.b16 %v14
  %v95 = vunpack.c.l.b16 %v15
  %v96 = vunpack.c.l.b16 %v16
  %v97 = vunpack.c.l.b16 %v17
  %v98 = vunpack.c.l.b16 %v18
  %v99 = vunpack.c.l.b16 %v19
  %v100 = vunpack.c.l.b16 %v20
  %v101 = vunpack.c.l.b16 %v21
  %v102 = vunpack.c.l.b16 %v22
  %v103 = vunpack.c.l.b16 %v23
  %v104 = vunpack.c.l.b16 %v24
  %v105 = vunpack.c.l.b16 %v25
  %v106 = vunpack.c.l.b16 %v26
  %v107 = vunpack.c.l.b16 %v27
  %v108 = vunpack.c.l.b16 %v28
  %v109 = vunpack.c.l.b16 %v29
  %v110 = vunpack.c.l.b16 %v30
  %v111 = vunpack.c.l.b16 %v31
  %v112 = vunpack.c.l.b16 %v32
  %v113 = vunpack.c.l.b16 %v33
  %v114 = vunpack.c.l.b16 %v34
  %v115 = vunpack.c.l.b16 %v35
  %v116 = vunpack.c.l.b16 %v36
  %v117 = vunpack.c.l.b16 %v37
  %v118 = vunpack.c.l.b16 %v38
  %v119 = vunpack.c.l.b16 %v39
  %v120 = vunpack.c.l.b16 %v40
  %v121 = vunpack.c.l.b16 %v41
  %v122 = vunpack.c.l.b16 %v42
  %v123 = vunpack.c.l.b16 %v43
  %v124 = vpack.c.b16 %v93, %v92
  %v125 = vpack.c.b16 %v95, %v94
  %v126 = vpack.c.b16 %v97, %v96
  %v127 = vpack.c.b16 %v99, %v98
  %v128 = vpack.c.b16 %v101, %v100
  %v129 = vpack.c.b16 %v103, %v102
  %v130 = vpack.c.b16 %v105, %v104
  %v131 = vpack.c.b16 %v107, %v106
  %v132 = vpack.c.b16 %v109, %v108
  %v133 = vpack.c.b16 %v111, %v110
  %v134 = vpack.c.b16 %v113, %v112
  %v135 = vpack.c.b16 %v115, %v114
  %v136 = vpack.c.b16 %v117, %v116
  %v137 = vpack.c.b16 %v119, %v118
  %v138 = vpack.c.b16 %v121, %v120
  %v139 = vpack.c.b16 %v123, %v122
  %v172 = vunpack.c.l.b16 %v44
  %v173 = vunpack.c.l.b16 %v45
  %v174 = vunpack.c.l.b16 %v46
  %v175 = vunpack.c.l.b16 %v47
  %v176 = vunpack.c.l.b16 %v48
  %v177 = vunpack.c.l.b16 %v49
  %v178 = vunpack.c.l.b16 %v50
  %v179 = vunpack.c.l.b16 %v51
  %v180 = vunpack.c.l.b16 %v52
  %v181 = vunpack.c.l.b16 %v53
  %v182 = vunpack.c.l.b16 %v54
  %v183 = vunpack.c.l.b16 %v55
  %v184 = vunpack.c.l.b16 %v56
  %v185 = vunpack.c.l.b16 %v57
  %v186 = vunpack.c.l.b16 %v58
  %v187 = vunpack.c.l.b16 %v59
  %v188 = vpack.c.b16 %v173, %v172
  %v189 = vpack.c.b16 %v175, %v174
  %v190 = vpack.c.b16 %v177, %v176
  %v191 = vpack.c.b16 %v179, %v178
  %v192 = vpack.c.b16 %v181, %v180
  %v193 = vpack.c.b16 %v183, %v182
  %v194 = vpack.c.b16 %v185, %v184
  %v195 = vpack.c.b16 %v187, %v186
  %204 = vmatprep.subr.bf16.mxu0 0
  %205 = vmatpush1.bf16.msra.mxu0 %v188
  %206 = vmatprep.subr.bf16.mxu0 0
  %207 = vmatpush1.bf16.msra.mxu0 %v189
  %208 = vmatprep.subr.bf16.mxu0 0
  %209 = vmatpush1.bf16.msra.mxu0 %v190
  %210 = vmatprep.subr.bf16.mxu0 0
  %211 = vmatpush1.bf16.msra.mxu0 %v191
  %212 = vmatprep.subr.bf16.mxu0 0
  %213 = vmatpush1.bf16.msra.mxu0 %v192
  %214 = vmatprep.subr.bf16.mxu0 0
  %215 = vmatpush1.bf16.msra.mxu0 %v193
  %216 = vmatprep.subr.bf16.mxu0 0
  %217 = vmatpush1.bf16.msra.mxu0 %v194
  %218 = vmatprep.subr.bf16.mxu0 0
  %219 = vmatpush1.bf16.msra.mxu0 %v195
  %220 = vmatprep.subr.bf16.mxu0 0
  %221 = vmatpush1.bf16.msra.mxu0 0
  %222 = vmatprep.subr.bf16.mxu0 0
  %223 = vmatpush1.bf16.msra.mxu0 0
  %224 = vmatprep.subr.bf16.mxu0 0
  %225 = vmatpush1.bf16.msra.mxu0 0
  %226 = vmatprep.subr.bf16.mxu0 0
  %227 = vmatpush1.bf16.msra.mxu0 0
  %228 = vmatprep.subr.bf16.mxu0 0
  %229 = vmatpush1.bf16.msra.mxu0 0
  %230 = vmatprep.subr.bf16.mxu0 0
  %231 = vmatpush1.bf16.msra.mxu0 0
  %232 = vmatprep.subr.bf16.mxu0 0
  %233 = vmatpush1.bf16.msra.mxu0 0
  %234 = vmatprep.subr.bf16.mxu0 0
  %235 = vmatpush1.bf16.msra.mxu0 0
  %236 = vmatprep.mubr.bf16.mxu0 0
  %237 = vmatmul.mubr.bf16.gmra.mrb[0].mxu0 %v124
  %v238 = vpop.f32.mrb[0].mxu0
  %v239 = vadd.f32 0.0, %v238
  %v240 = vpop.f32.mrb[0].mxu0
  %v241 = vpop.f32.mrb[0].mxu0
  %v242 = vadd.f32 0.0, %v241
  %v243 = vpop.f32.mrb[0].mxu0
  %244 = vmatprep.mubr.bf16.mxu0 0
  %245 = vmatmul.mubr.bf16.gmra.mrb[0].mxu0 %v125
  %v246 = vpop.f32.mrb[0].mxu0
  %v247 = vadd.f32 0.0, %v246
  %v248 = vpop.f32.mrb[0].mxu0
  %v249 = vpop.f32.mrb[0].mxu0
  %v250 = vadd.f32 0.0, %v249
  %v251 = vpop.f32.mrb[0].mxu0
  %252 = vmatprep.mubr.bf16.mxu0 0
  %253 = vmatmul.mubr.bf16.gmra.mrb[0].mxu0 %v126
  %v254 = vpop.f32.mrb[0].mxu0
  %v255 = vadd.f32 0.0, %v254
  %v256 = vpop.f32.mrb[0].mxu0
  %v257 = vpop.f32.mrb[0].mxu0
  %v258 = vadd.f32 0.0, %v257
  %v259 = vpop.f32.mrb[0].mxu0
  %260 = vmatprep.mubr.bf16.mxu0 0
  %261 = vmatmul.mubr.bf16.gmra.mrb[0].mxu0 %v127
  %v262 = vpop.f32.mrb[0].mxu0
  %v263 = vadd.f32 0.0, %v262
  %v264 = vpop.f32.mrb[0].mxu0
  %v265 = vpop.f32.mrb[0].mxu0
  %v266 = vadd.f32 0.0, %v265
  %v267 = vpop.f32.mrb[0].mxu0
  %268 = vmatprep.mubr.bf16.mxu0 0
  %269 = vmatmul.mubr.bf16.gmra.mrb[0].mxu0 %v128
  %v270 = vpop.f32.mrb[0].mxu0
  %v271 = vadd.f32 0.0, %v270
  %v272 = vpop.f32.mrb[0].mxu0
  %v273 = vpop.f32.mrb[0].mxu0
  %v274 = vadd.f32 0.0, %v273
  %v275 = vpop.f32.mrb[0].mxu0
  %276 = vmatprep.mubr.bf16.mxu0 0
  %277 = vmatmul.mubr.bf16.gmra.mrb[0].mxu0 %v129
  %v278 = vpop.f32.mrb[0].mxu0
  %v279 = vadd.f32 0.0, %v278
  %v280 = vpop.f32.mrb[0].mxu0
  %v281 = vpop.f32.mrb[0].mxu0
  %v282 = vadd.f32 0.0, %v281
  %v283 = vpop.f32.mrb[0].mxu0
  %284 = vmatprep.mubr.bf16.mxu0 0
  %285 = vmatmul.mubr.bf16.gmra.mrb[0].mxu0 %v130
  %v286 = vpop.f32.mrb[0].mxu0
  %v287 = vadd.f32 0.0, %v286
  %v288 = vpop.f32.mrb[0].mxu0
  %v289 = vpop.f32.mrb[0].mxu0
  %v290 = vadd.f32 0.0, %v289
  %v291 = vpop.f32.mrb[0].mxu0
  %292 = vmatprep.mubr.bf16.mxu0 0
  %293 = vmatmul.mubr.bf16.gmra.mrb[0].mxu0 %v131
  %v294 = vpop.f32.mrb[0].mxu0
  %v295 = vadd.f32 0.0, %v294
  %v296 = vpop.f32.mrb[0].mxu0
  %v297 = vpop.f32.mrb[0].mxu0
  %v298 = vadd.f32 0.0, %v297
  %v299 = vpop.f32.mrb[0].mxu0
  %300 = vmatprep.mubr.bf16.mxu0 0
  %301 = vmatmul.mubr.bf16.gmra.mrb[0].mxu0 %v132
  %v302 = vpop.f32.mrb[0].mxu0
  %v303 = vadd.f32 0.0, %v302
  %v304 = vpop.f32.mrb[0].mxu0
  %v305 = vpop.f32.mrb[0].mxu0
  %v306 = vadd.f32 0.0, %v305
  %v307 = vpop.f32.mrb[0].mxu0
  %308 = vmatprep.mubr.bf16.mxu0 0
  %309 = vmatmul.mubr.bf16.gmra.mrb[0].mxu0 %v133
  %v310 = vpop.f32.mrb[0].mxu0
  %v311 = vadd.f32 0.0, %v310
  %v312 = vpop.f32.mrb[0].mxu0
  %v313 = vpop.f32.mrb[0].mxu0
  %v314 = vadd.f32 0.0, %v313
  %v315 = vpop.f32.mrb[0].mxu0
  %316 = vmatprep.mubr.bf16.mxu0 0
  %317 = vmatmul.mubr.bf16.gmra.mrb[0].mxu0 %v134
  %v318 = vpop.f32.mrb[0].mxu0
  %v319 = vadd.f32 0.0, %v318
  %v320 = vpop.f32.mrb[0].mxu0
  %v321 = vpop.f32.mrb[0].mxu0
  %v322 = vadd.f32 0.0, %v321
  %v323 = vpop.f32.mrb[0].mxu0
  %324 = vmatprep.mubr.bf16.mxu0 0
  %325 = vmatmul.mubr.bf16.gmra.mrb[0].mxu0 %v135
  %v326 = vpop.f32.mrb[0].mxu0
  %v327 = vadd.f32 0.0, %v326
  %v328 = vpop.f32.mrb[0].mxu0
  %v329 = vpop.f32.mrb[0].mxu0
  %v330 = vadd.f32 0.0, %v329
  %v331 = vpop.f32.mrb[0].mxu0
  %332 = vmatprep.mubr.bf16.mxu0 0
  %333 = vmatmul.mubr.bf16.gmra.mrb[0].mxu0 %v136
  %v334 = vpop.f32.mrb[0].mxu0
  %v335 = vadd.f32 0.0, %v334
  %v336 = vpop.f32.mrb[0].mxu0
  %v337 = vpop.f32.mrb[0].mxu0
  %v338 = vadd.f32 0.0, %v337
  %v339 = vpop.f32.mrb[0].mxu0
  %340 = vmatprep.mubr.bf16.mxu0 0
  %341 = vmatmul.mubr.bf16.gmra.mrb[0].mxu0 %v137
  %v342 = vpop.f32.mrb[0].mxu0
  %v343 = vadd.f32 0.0, %v342
  %v344 = vpop.f32.mrb[0].mxu0
  %v345 = vpop.f32.mrb[0].mxu0
  %v346 = vadd.f32 0.0, %v345
  %v347 = vpop.f32.mrb[0].mxu0
  %348 = vmatprep.mubr.bf16.mxu0 0
  %349 = vmatmul.mubr.bf16.gmra.mrb[0].mxu0 %v138
  %v350 = vpop.f32.mrb[0].mxu0
  %v351 = vadd.f32 0.0, %v350
  %v352 = vpop.f32.mrb[0].mxu0
  %v353 = vpop.f32.mrb[0].mxu0
  %v354 = vadd.f32 0.0, %v353
  %v355 = vpop.f32.mrb[0].mxu0
  %356 = vmatprep.mubr.bf16.mxu0 0
  %357 = vmatmul.mubr.bf16.gmra.mrb[0].mxu0 %v139
  %v358 = vpop.f32.mrb[0].mxu0
  %v359 = vadd.f32 0.0, %v358
  %v360 = vpop.f32.mrb[0].mxu0
  %v361 = vpop.f32.mrb[0].mxu0
  %v362 = vadd.f32 0.0, %v361
  %v363 = vpop.f32.mrb[0].mxu0
  %364 = vdwg.mxu0
  %v365 = vpack.c.bf16 %v242, %v239
  %v366 = vpack.c.bf16 %v250, %v247
  %v367 = vpack.c.bf16 %v258, %v255
  %v368 = vpack.c.bf16 %v266, %v263
  %v369 = vpack.c.bf16 %v274, %v271
  %v370 = vpack.c.bf16 %v282, %v279
  %v371 = vpack.c.bf16 %v290, %v287
  %v372 = vpack.c.bf16 %v298, %v295
  %v373 = vpack.c.bf16 %v306, %v303
  %v374 = vpack.c.bf16 %v314, %v311
  %v375 = vpack.c.bf16 %v322, %v319
  %v376 = vpack.c.bf16 %v330, %v327
  %v377 = vpack.c.bf16 %v338, %v335
  %v378 = vpack.c.bf16 %v346, %v343
  %v379 = vpack.c.bf16 %v354, %v351
  %v380 = vpack.c.bf16 %v362, %v359
  %v397 = vunpack.c.l.b16 %v365
  %v398 = vunpack.c.h.b16 %v365
  %v399 = vunpack.c.l.b16 %v366
  %v400 = vunpack.c.h.b16 %v366
  %v401 = vunpack.c.l.b16 %v367
  %v402 = vunpack.c.h.b16 %v367
  %v403 = vunpack.c.l.b16 %v368
  %v404 = vunpack.c.h.b16 %v368
  %v405 = vunpack.c.l.b16 %v369
  %v406 = vunpack.c.h.b16 %v369
  %v407 = vunpack.c.l.b16 %v370
  %v408 = vunpack.c.h.b16 %v370
  %v409 = vunpack.c.l.b16 %v371
  %v410 = vunpack.c.h.b16 %v371
  %v411 = vunpack.c.l.b16 %v372
  %v412 = vunpack.c.h.b16 %v372
  %v413 = vunpack.c.l.b16 %v373
  %v414 = vunpack.c.h.b16 %v373
  %v415 = vunpack.c.l.b16 %v374
  %v416 = vunpack.c.h.b16 %v374
  %v417 = vunpack.c.l.b16 %v375
  %v418 = vunpack.c.h.b16 %v375
  %v419 = vunpack.c.l.b16 %v376
  %v420 = vunpack.c.h.b16 %v376
  %v421 = vunpack.c.l.b16 %v377
  %v422 = vunpack.c.h.b16 %v377
  %v423 = vunpack.c.l.b16 %v378
  %v424 = vunpack.c.h.b16 %v378
  %v425 = vunpack.c.l.b16 %v379
  %v426 = vunpack.c.h.b16 %v379
  %v427 = vunpack.c.l.b16 %v380
  %v428 = vunpack.c.h.b16 %v380
  %v429 = vpack.c.b16 %v397, %v397
  %v430 = vpack.c.b16 %v398, %v398
  %v431 = vpack.c.b16 %v399, %v399
  %v432 = vpack.c.b16 %v400, %v400
  %v433 = vpack.c.b16 %v401, %v401
  %v434 = vpack.c.b16 %v402, %v402
  %v435 = vpack.c.b16 %v403, %v403
  %v436 = vpack.c.b16 %v404, %v404
  %v437 = vpack.c.b16 %v405, %v405
  %v438 = vpack.c.b16 %v406, %v406
  %v439 = vpack.c.b16 %v407, %v407
  %v440 = vpack.c.b16 %v408, %v408
  %v441 = vpack.c.b16 %v409, %v409
  %v442 = vpack.c.b16 %v410, %v410
  %v443 = vpack.c.b16 %v411, %v411
  %v444 = vpack.c.b16 %v412, %v412
  %v445 = vpack.c.b16 %v413, %v413
  %v446 = vpack.c.b16 %v414, %v414
  %v447 = vpack.c.b16 %v415, %v415
  %v448 = vpack.c.b16 %v416, %v416
  %v449 = vpack.c.b16 %v417, %v417
  %v450 = vpack.c.b16 %v418, %v418
  %v451 = vpack.c.b16 %v419, %v419
  %v452 = vpack.c.b16 %v420, %v420
  %v453 = vpack.c.b16 %v421, %v421
  %v454 = vpack.c.b16 %v422, %v422
  %v455 = vpack.c.b16 %v423, %v423
  %v456 = vpack.c.b16 %v424, %v424
  %v457 = vpack.c.b16 %v425, %v425
  %v458 = vpack.c.b16 %v426, %v426
  %v459 = vpack.c.b16 %v427, %v427
  %v460 = vpack.c.b16 %v428, %v428
  %493 = vst [vmem:[%s2] sm:$0xf] %v429
  %494 = vst [vmem:[%s2 + $0x4] sm:$0xf] %v430
  %495 = vst [vmem:[%s2 + $0x8] sm:$0xf] %v431
  %496 = vst [vmem:[%s2 + $0xc] sm:$0xf] %v432
  %497 = vst [vmem:[%s2 + $0x10] sm:$0xf] %v433
  %498 = vst [vmem:[%s2 + $0x14] sm:$0xf] %v434
  %499 = vst [vmem:[%s2 + $0x18] sm:$0xf] %v435
  %500 = vst [vmem:[%s2 + $0x1c] sm:$0xf] %v436
  %501 = vst [vmem:[%s2 + $0x20] sm:$0xf] %v437
  %502 = vst [vmem:[%s2 + $0x24] sm:$0xf] %v438
  %503 = vst [vmem:[%s2 + $0x28] sm:$0xf] %v439
  %504 = vst [vmem:[%s2 + $0x2c] sm:$0xf] %v440
  %505 = vst [vmem:[%s2 + $0x30] sm:$0xf] %v441
  %506 = vst [vmem:[%s2 + $0x34] sm:$0xf] %v442
  %507 = vst [vmem:[%s2 + $0x38] sm:$0xf] %v443
  %508 = vst [vmem:[%s2 + $0x3c] sm:$0xf] %v444
  %509 = vst [vmem:[%s2 + $0x40] sm:$0xf] %v445
  %510 = vst [vmem:[%s2 + $0x44] sm:$0xf] %v446
  %511 = vst [vmem:[%s2 + $0x48] sm:$0xf] %v447
  %512 = vst [vmem:[%s2 + $0x4c] sm:$0xf] %v448
  %513 = vst [vmem:[%s2 + $0x50] sm:$0xf] %v449
  %514 = vst [vmem:[%s2 + $0x54] sm:$0xf] %v450
  %515 = vst [vmem:[%s2 + $0x58] sm:$0xf] %v451
  %516 = vst [vmem:[%s2 + $0x5c] sm:$0xf] %v452
  %517 = vst [vmem:[%s2 + $0x60] sm:$0xf] %v453
  %518 = vst [vmem:[%s2 + $0x64] sm:$0xf] %v454
  %519 = vst [vmem:[%s2 + $0x68] sm:$0xf] %v455
  %520 = vst [vmem:[%s2 + $0x6c] sm:$0xf] %v456
  %521 = vst [vmem:[%s2 + $0x70] sm:$0xf] %v457
  %522 = vst [vmem:[%s2 + $0x74] sm:$0xf] %v458
  %523 = vst [vmem:[%s2 + $0x78] sm:$0xf] %v459
  %524 = vst [vmem:[%s2 + $0x7c] sm:$0xf] %v460
  // Predicated region
  $region10: #{gcn_layer.2} parent=0 // pred_check
    _
  $region11: #{gcn_layer.2} parent=0 // pred_check_branch
    %526 = sbr.rel (0) target = $region13
  $region12: #{gcn_layer.2} parent=0 // pred_region
    _
  $region13: #{gcn_layer.2} parent=0 // pred_fallthru
    _
  // Predicated region
  $region14: #{gcn_layer.2} parent=0 // pred_check
    _
  $region15: #{gcn_layer.2} parent=0 // pred_check_branch
    %528 = sbr.rel (0) target = $region17
  $region16: #{gcn_layer.2} parent=0 // pred_region
    _
  $region17: #{gcn_layer.2} parent=0 // pred_fallthru
    _

// kernel: gcn_layer.3
$region0: #{gcn_layer.3}
  #allocation0 [shape = 'u32[]', space=smem, size = 0x4, offset = 0x4, fixed_abs, tag = 'smem constant byte address 0x4 - core index']
  #allocation1 [shape = 'u32[144,128]{1,0:T(1,128)}', space=vmem, size = 0x12000, scoped, tag = 'internal scratch']
  #allocation2 [shape = 'f32[256,128]{1,0:T(8,128)}', space=vmem, size = 0x20000, scoped, tag = 'scratch operand']
  %s0 = inlined_call_operand.vmem [shape: bf16[256,256], index: 0, kind: input, shape index: {}]
  %s1 = inlined_call_operand.vmem [shape: bf16[256,128], index: 1, kind: input, shape index: {}]
  %s2 = inlined_call_operand.vmem [shape: f32[1,128], index: 2, kind: input, shape index: {}]
  %s3 = inlined_call_operand.vmem [shape: bf16[256,128], index: 3, kind: output, shape index: {}]
  %s4 = sld [smem:[#allocation0]]
  $region30: #{gcn_layer.3} parent=0
    _
  %s6 = ssub.s32 1, %s4
  %s7 = scalar_select 0, %s6, %s4
  // Predicated region
  $region2: #{gcn_layer.3} parent=0 // pred_check
    _
  $region3: #{gcn_layer.3} parent=0 // pred_check_branch
    %9 = sbr.rel (0) target = $region5
  $region4: #{gcn_layer.3} parent=0 // pred_region
    _
  $region5: #{gcn_layer.3} parent=0 // pred_fallthru
    _
  // Predicated region
  $region6: #{gcn_layer.3} parent=0 // pred_check
    _
  $region7: #{gcn_layer.3} parent=0 // pred_check_branch
    %11 = sbr.rel (0) target = $region9
  $region8: #{gcn_layer.3} parent=0 // pred_region
    _
  $region9: #{gcn_layer.3} parent=0 // pred_fallthru
    _
  // Predicated region
  $region10: #{gcn_layer.3} parent=0 // pred_check
    _
  $region11: #{gcn_layer.3} parent=0 // pred_check_branch
    %13 = sbr.rel (0) target = $region13
  $region12: #{gcn_layer.3} parent=0 // pred_region
    _
  $region13: #{gcn_layer.3} parent=0 // pred_fallthru
    _
  %p15 = scmp.eq.s32.totalorder 0, 0
  // Predicated region
  $region14: #{gcn_layer.3} parent=0 // pred_check
    %p16 = pneg %p15
  $region15: #{gcn_layer.3} parent=0 // pred_check_branch
    %18 = sbr.rel (%p16) target = $region17
  $region16: #{gcn_layer.3} parent=0 // pred_region
    %19 = vst [vmem:[#allocation2] sm:$0xff] 0.0
    %20 = vst [vmem:[#allocation2 + $0x8] sm:$0xff] 0.0
    %21 = vst [vmem:[#allocation2 + $0x10] sm:$0xff] 0.0
    %22 = vst [vmem:[#allocation2 + $0x18] sm:$0xff] 0.0
    %23 = vst [vmem:[#allocation2 + $0x20] sm:$0xff] 0.0
    %24 = vst [vmem:[#allocation2 + $0x28] sm:$0xff] 0.0
    %25 = vst [vmem:[#allocation2 + $0x30] sm:$0xff] 0.0
    %26 = vst [vmem:[#allocation2 + $0x38] sm:$0xff] 0.0
    %27 = vst [vmem:[#allocation2 + $0x40] sm:$0xff] 0.0
    %28 = vst [vmem:[#allocation2 + $0x48] sm:$0xff] 0.0
    %29 = vst [vmem:[#allocation2 + $0x50] sm:$0xff] 0.0
    %30 = vst [vmem:[#allocation2 + $0x58] sm:$0xff] 0.0
    %31 = vst [vmem:[#allocation2 + $0x60] sm:$0xff] 0.0
    %32 = vst [vmem:[#allocation2 + $0x68] sm:$0xff] 0.0
    %33 = vst [vmem:[#allocation2 + $0x70] sm:$0xff] 0.0
    %34 = vst [vmem:[#allocation2 + $0x78] sm:$0xff] 0.0
    %35 = vst [vmem:[#allocation2 + $0x80] sm:$0xff] 0.0
    %36 = vst [vmem:[#allocation2 + $0x88] sm:$0xff] 0.0
    %37 = vst [vmem:[#allocation2 + $0x90] sm:$0xff] 0.0
    %38 = vst [vmem:[#allocation2 + $0x98] sm:$0xff] 0.0
    %39 = vst [vmem:[#allocation2 + $0xa0] sm:$0xff] 0.0
    %40 = vst [vmem:[#allocation2 + $0xa8] sm:$0xff] 0.0
    %41 = vst [vmem:[#allocation2 + $0xb0] sm:$0xff] 0.0
    %42 = vst [vmem:[#allocation2 + $0xb8] sm:$0xff] 0.0
    %43 = vst [vmem:[#allocation2 + $0xc0] sm:$0xff] 0.0
    %44 = vst [vmem:[#allocation2 + $0xc8] sm:$0xff] 0.0
    %45 = vst [vmem:[#allocation2 + $0xd0] sm:$0xff] 0.0
    %46 = vst [vmem:[#allocation2 + $0xd8] sm:$0xff] 0.0
    %47 = vst [vmem:[#allocation2 + $0xe0] sm:$0xff] 0.0
    %48 = vst [vmem:[#allocation2 + $0xe8] sm:$0xff] 0.0
    %49 = vst [vmem:[#allocation2 + $0xf0] sm:$0xff] 0.0
    %50 = vst [vmem:[#allocation2 + $0xf8] sm:$0xff] 0.0
  $region17: #{gcn_layer.3} parent=0 // pred_fallthru
    _
  %s51 = smul.u32 0, 256
  %s52 = sshra.s32 %s51, 3
  %s53 = sand.u32 %s51, 7
  %s54 = smul.addr %s52, 4
  %s55 = scalar_lea.vmem %s1, %s54
  %v56 = vld [vmem:[%s55] sm:$0xf]
  %v57 = vld [vmem:[%s55 + $0x4] sm:$0xf]
  %v58 = vld [vmem:[%s55 + $0x8] sm:$0xf]
  %v59 = vld [vmem:[%s55 + $0xc] sm:$0xf]
  %v60 = vld [vmem:[%s55 + $0x10] sm:$0xf]
  %v61 = vld [vmem:[%s55 + $0x14] sm:$0xf]
  %v62 = vld [vmem:[%s55 + $0x18] sm:$0xf]
  %v63 = vld [vmem:[%s55 + $0x1c] sm:$0xf]
  %v64 = vld [vmem:[%s55 + $0x20] sm:$0xf]
  %v65 = vld [vmem:[%s55 + $0x24] sm:$0xf]
  %v66 = vld [vmem:[%s55 + $0x28] sm:$0xf]
  %v67 = vld [vmem:[%s55 + $0x2c] sm:$0xf]
  %v68 = vld [vmem:[%s55 + $0x30] sm:$0xf]
  %v69 = vld [vmem:[%s55 + $0x34] sm:$0xf]
  %v70 = vld [vmem:[%s55 + $0x38] sm:$0xf]
  %v71 = vld [vmem:[%s55 + $0x3c] sm:$0xf]
  %v72 = vld [vmem:[%s55 + $0x40] sm:$0xf]
  %v73 = vld [vmem:[%s55 + $0x44] sm:$0xf]
  %v74 = vld [vmem:[%s55 + $0x48] sm:$0xf]
  %v75 = vld [vmem:[%s55 + $0x4c] sm:$0xf]
  %v76 = vld [vmem:[%s55 + $0x50] sm:$0xf]
  %v77 = vld [vmem:[%s55 + $0x54] sm:$0xf]
  %v78 = vld [vmem:[%s55 + $0x58] sm:$0xf]
  %v79 = vld [vmem:[%s55 + $0x5c] sm:$0xf]
  %v80 = vld [vmem:[%s55 + $0x60] sm:$0xf]
  %v81 = vld [vmem:[%s55 + $0x64] sm:$0xf]
  %v82 = vld [vmem:[%s55 + $0x68] sm:$0xf]
  %v83 = vld [vmem:[%s55 + $0x6c] sm:$0xf]
  %v84 = vld [vmem:[%s55 + $0x70] sm:$0xf]
  %v85 = vld [vmem:[%s55 + $0x74] sm:$0xf]
  %v86 = vld [vmem:[%s55 + $0x78] sm:$0xf]
  %v87 = vld [vmem:[%s55 + $0x7c] sm:$0xf]
  %v88 = vld [vmem:[#allocation2] sm:$0xff]
  %v89 = vld [vmem:[#allocation2 + $0x8] sm:$0xff]
  %v90 = vld [vmem:[#allocation2 + $0x10] sm:$0xff]
  %v91 = vld [vmem:[#allocation2 + $0x18] sm:$0xff]
  %v92 = vld [vmem:[#allocation2 + $0x20] sm:$0xff]
  %v93 = vld [vmem:[#allocation2 + $0x28] sm:$0xff]
  %v94 = vld [vmem:[#allocation2 + $0x30] sm:$0xff]
  %v95 = vld [vmem:[#allocation2 + $0x38] sm:$0xff]
  %v96 = vld [vmem:[#allocation2 + $0x40] sm:$0xff]
  %v97 = vld [vmem:[#allocation2 + $0x48] sm:$0xff]
  %v98 = vld [vmem:[#allocation2 + $0x50] sm:$0xff]
  %v99 = vld [vmem:[#allocation2 + $0x58] sm:$0xff]
  %v100 = vld [vmem:[#allocation2 + $0x60] sm:$0xff]
  %v101 = vld [vmem:[#allocation2 + $0x68] sm:$0xff]
  %v102 = vld [vmem:[#allocation2 + $0x70] sm:$0xff]
  %v103 = vld [vmem:[#allocation2 + $0x78] sm:$0xff]
  %v104 = vld [vmem:[#allocation2 + $0x80] sm:$0xff]
  %v105 = vld [vmem:[#allocation2 + $0x88] sm:$0xff]
  %v106 = vld [vmem:[#allocation2 + $0x90] sm:$0xff]
  %v107 = vld [vmem:[#allocation2 + $0x98] sm:$0xff]
  %v108 = vld [vmem:[#allocation2 + $0xa0] sm:$0xff]
  %v109 = vld [vmem:[#allocation2 + $0xa8] sm:$0xff]
  %v110 = vld [vmem:[#allocation2 + $0xb0] sm:$0xff]
  %v111 = vld [vmem:[#allocation2 + $0xb8] sm:$0xff]
  %v112 = vld [vmem:[#allocation2 + $0xc0] sm:$0xff]
  %v113 = vld [vmem:[#allocation2 + $0xc8] sm:$0xff]
  %v114 = vld [vmem:[#allocation2 + $0xd0] sm:$0xff]
  %v115 = vld [vmem:[#allocation2 + $0xd8] sm:$0xff]
  %v116 = vld [vmem:[#allocation2 + $0xe0] sm:$0xff]
  %v117 = vld [vmem:[#allocation2 + $0xe8] sm:$0xff]
  %v118 = vld [vmem:[#allocation2 + $0xf0] sm:$0xff]
  %v119 = vld [vmem:[#allocation2 + $0xf8] sm:$0xff]
  %v120 = vld [vmem:[%s0] sm:$0xff]
  %v121 = vld [vmem:[%s0 + $0x8] sm:$0xff]
  %v122 = vld [vmem:[%s0 + $0x10] sm:$0xff]
  %v123 = vld [vmem:[%s0 + $0x18] sm:$0xff]
  %v124 = vld [vmem:[%s0 + $0x20] sm:$0xff]
  %v125 = vld [vmem:[%s0 + $0x28] sm:$0xff]
  %v126 = vld [vmem:[%s0 + $0x30] sm:$0xff]
  %v127 = vld [vmem:[%s0 + $0x38] sm:$0xff]
  %v128 = vld [vmem:[%s0 + $0x40] sm:$0xff]
  %v129 = vld [vmem:[%s0 + $0x48] sm:$0xff]
  %v130 = vld [vmem:[%s0 + $0x50] sm:$0xff]
  %v131 = vld [vmem:[%s0 + $0x58] sm:$0xff]
  %v132 = vld [vmem:[%s0 + $0x60] sm:$0xff]
  %v133 = vld [vmem:[%s0 + $0x68] sm:$0xff]
  %v134 = vld [vmem:[%s0 + $0x70] sm:$0xff]
  %v135 = vld [vmem:[%s0 + $0x78] sm:$0xff]
  %v136 = vld [vmem:[%s0 + $0x80] sm:$0xff]
  %v137 = vld [vmem:[%s0 + $0x88] sm:$0xff]
  %v138 = vld [vmem:[%s0 + $0x90] sm:$0xff]
  %v139 = vld [vmem:[%s0 + $0x98] sm:$0xff]
  %v140 = vld [vmem:[%s0 + $0xa0] sm:$0xff]
  %v141 = vld [vmem:[%s0 + $0xa8] sm:$0xff]
  %v142 = vld [vmem:[%s0 + $0xb0] sm:$0xff]
  %v143 = vld [vmem:[%s0 + $0xb8] sm:$0xff]
  %v144 = vld [vmem:[%s0 + $0xc0] sm:$0xff]
  %v145 = vld [vmem:[%s0 + $0xc8] sm:$0xff]
  %v146 = vld [vmem:[%s0 + $0xd0] sm:$0xff]
  %v147 = vld [vmem:[%s0 + $0xd8] sm:$0xff]
  %v148 = vld [vmem:[%s0 + $0xe0] sm:$0xff]
  %v149 = vld [vmem:[%s0 + $0xe8] sm:$0xff]
  %v150 = vld [vmem:[%s0 + $0xf0] sm:$0xff]
  %v151 = vld [vmem:[%s0 + $0xf8] sm:$0xff]
  %v184 = vunpack.c.l.b16 %v120
  %v185 = vunpack.c.h.b16 %v120
  %v186 = vunpack.c.l.b16 %v121
  %v187 = vunpack.c.h.b16 %v121
  %v188 = vunpack.c.l.b16 %v122
  %v189 = vunpack.c.h.b16 %v122
  %v190 = vunpack.c.l.b16 %v123
  %v191 = vunpack.c.h.b16 %v123
  %v192 = vunpack.c.l.b16 %v124
  %v193 = vunpack.c.h.b16 %v124
  %v194 = vunpack.c.l.b16 %v125
  %v195 = vunpack.c.h.b16 %v125
  %v196 = vunpack.c.l.b16 %v126
  %v197 = vunpack.c.h.b16 %v126
  %v198 = vunpack.c.l.b16 %v127
  %v199 = vunpack.c.h.b16 %v127
  %v200 = vunpack.c.l.b16 %v128
  %v201 = vunpack.c.h.b16 %v128
  %v202 = vunpack.c.l.b16 %v129
  %v203 = vunpack.c.h.b16 %v129
  %v204 = vunpack.c.l.b16 %v130
  %v205 = vunpack.c.h.b16 %v130
  %v206 = vunpack.c.l.b16 %v131
  %v207 = vunpack.c.h.b16 %v131
  %v208 = vunpack.c.l.b16 %v132
  %v209 = vunpack.c.h.b16 %v132
  %v210 = vunpack.c.l.b16 %v133
  %v211 = vunpack.c.h.b16 %v133
  %v212 = vunpack.c.l.b16 %v134
  %v213 = vunpack.c.h.b16 %v134
  %v214 = vunpack.c.l.b16 %v135
  %v215 = vunpack.c.h.b16 %v135
  %v216 = vunpack.c.l.b16 %v136
  %v217 = vunpack.c.h.b16 %v136
  %v218 = vunpack.c.l.b16 %v137
  %v219 = vunpack.c.h.b16 %v137
  %v220 = vunpack.c.l.b16 %v138
  %v221 = vunpack.c.h.b16 %v138
  %v222 = vunpack.c.l.b16 %v139
  %v223 = vunpack.c.h.b16 %v139
  %v224 = vunpack.c.l.b16 %v140
  %v225 = vunpack.c.h.b16 %v140
  %v226 = vunpack.c.l.b16 %v141
  %v227 = vunpack.c.h.b16 %v141
  %v228 = vunpack.c.l.b16 %v142
  %v229 = vunpack.c.h.b16 %v142
  %v230 = vunpack.c.l.b16 %v143
  %v231 = vunpack.c.h.b16 %v143
  %v232 = vunpack.c.l.b16 %v144
  %v233 = vunpack.c.h.b16 %v144
  %v234 = vunpack.c.l.b16 %v145
  %v235 = vunpack.c.h.b16 %v145
  %v236 = vunpack.c.l.b16 %v146
  %v237 = vunpack.c.h.b16 %v146
  %v238 = vunpack.c.l.b16 %v147
  %v239 = vunpack.c.h.b16 %v147
  %v240 = vunpack.c.l.b16 %v148
  %v241 = vunpack.c.h.b16 %v148
  %v242 = vunpack.c.l.b16 %v149
  %v243 = vunpack.c.h.b16 %v149
  %v244 = vunpack.c.l.b16 %v150
  %v245 = vunpack.c.h.b16 %v150
  %v246 = vunpack.c.l.b16 %v151
  %v247 = vunpack.c.h.b16 %v151
  %v248 = vpack.c.b16 %v186, %v184
  %v249 = vpack.c.b16 %v187, %v185
  %v250 = vpack.c.b16 %v190, %v188
  %v251 = vpack.c.b16 %v191, %v189
  %v252 = vpack.c.b16 %v194, %v192
  %v253 = vpack.c.b16 %v195, %v193
  %v254 = vpack.c.b16 %v198, %v196
  %v255 = vpack.c.b16 %v199, %v197
  %v256 = vpack.c.b16 %v202, %v200
  %v257 = vpack.c.b16 %v203, %v201
  %v258 = vpack.c.b16 %v206, %v204
  %v259 = vpack.c.b16 %v207, %v205
  %v260 = vpack.c.b16 %v210, %v208
  %v261 = vpack.c.b16 %v211, %v209
  %v262 = vpack.c.b16 %v214, %v212
  %v263 = vpack.c.b16 %v215, %v213
  %v264 = vpack.c.b16 %v218, %v216
  %v265 = vpack.c.b16 %v219, %v217
  %v266 = vpack.c.b16 %v222, %v220
  %v267 = vpack.c.b16 %v223, %v221
  %v268 = vpack.c.b16 %v226, %v224
  %v269 = vpack.c.b16 %v227, %v225
  %v270 = vpack.c.b16 %v230, %v228
  %v271 = vpack.c.b16 %v231, %v229
  %v272 = vpack.c.b16 %v234, %v232
  %v273 = vpack.c.b16 %v235, %v233
  %v274 = vpack.c.b16 %v238, %v236
  %v275 = vpack.c.b16 %v239, %v237
  %v276 = vpack.c.b16 %v242, %v240
  %v277 = vpack.c.b16 %v243, %v241
  %v278 = vpack.c.b16 %v246, %v244
  %v279 = vpack.c.b16 %v247, %v245
  %v344 = vunpack.c.l.b16 %v56
  %v345 = vunpack.c.l.b16 %v57
  %v346 = vunpack.c.l.b16 %v58
  %v347 = vunpack.c.l.b16 %v59
  %v348 = vunpack.c.l.b16 %v60
  %v349 = vunpack.c.l.b16 %v61
  %v350 = vunpack.c.l.b16 %v62
  %v351 = vunpack.c.l.b16 %v63
  %v352 = vunpack.c.l.b16 %v64
  %v353 = vunpack.c.l.b16 %v65
  %v354 = vunpack.c.l.b16 %v66
  %v355 = vunpack.c.l.b16 %v67
  %v356 = vunpack.c.l.b16 %v68
  %v357 = vunpack.c.l.b16 %v69
  %v358 = vunpack.c.l.b16 %v70
  %v359 = vunpack.c.l.b16 %v71
  %v360 = vunpack.c.l.b16 %v72
  %v361 = vunpack.c.l.b16 %v73
  %v362 = vunpack.c.l.b16 %v74
  %v363 = vunpack.c.l.b16 %v75
  %v364 = vunpack.c.l.b16 %v76
  %v365 = vunpack.c.l.b16 %v77
  %v366 = vunpack.c.l.b16 %v78
  %v367 = vunpack.c.l.b16 %v79
  %v368 = vunpack.c.l.b16 %v80
  %v369 = vunpack.c.l.b16 %v81
  %v370 = vunpack.c.l.b16 %v82
  %v371 = vunpack.c.l.b16 %v83
  %v372 = vunpack.c.l.b16 %v84
  %v373 = vunpack.c.l.b16 %v85
  %v374 = vunpack.c.l.b16 %v86
  %v375 = vunpack.c.l.b16 %v87
  %v376 = vpack.c.b16 %v345, %v344
  %v377 = vpack.c.b16 %v347, %v346
  %v378 = vpack.c.b16 %v349, %v348
  %v379 = vpack.c.b16 %v351, %v350
  %v380 = vpack.c.b16 %v353, %v352
  %v381 = vpack.c.b16 %v355, %v354
  %v382 = vpack.c.b16 %v357, %v356
  %v383 = vpack.c.b16 %v359, %v358
  %v384 = vpack.c.b16 %v361, %v360
  %v385 = vpack.c.b16 %v363, %v362
  %v386 = vpack.c.b16 %v365, %v364
  %v387 = vpack.c.b16 %v367, %v366
  %v388 = vpack.c.b16 %v369, %v368
  %v389 = vpack.c.b16 %v371, %v370
  %v390 = vpack.c.b16 %v373, %v372
  %v391 = vpack.c.b16 %v375, %v374
  %408 = vmatprep.subr.bf16.mxu0 0
  %409 = vmatpush1.bf16.msra.mxu0 %v376
  %410 = vmatprep.subr.bf16.mxu0 0
  %411 = vmatpush1.bf16.msra.mxu0 %v377
  %412 = vmatprep.subr.bf16.mxu0 0
  %413 = vmatpush1.bf16.msra.mxu0 %v378
  %414 = vmatprep.subr.bf16.mxu0 0
  %415 = vmatpush1.bf16.msra.mxu0 %v379
  %416 = vmatprep.subr.bf16.mxu0 0
  %417 = vmatpush1.bf16.msra.mxu0 %v380
  %418 = vmatprep.subr.bf16.mxu0 0
  %419 = vmatpush1.bf16.msra.mxu0 %v381
  %420 = vmatprep.subr.bf16.mxu0 0
  %421 = vmatpush1.bf16.msra.mxu0 %v382
  %422 = vmatprep.subr.bf16.mxu0 0
  %423 = vmatpush1.bf16.msra.mxu0 %v383
  %424 = vmatprep.subr.bf16.mxu0 0
  %425 = vmatpush1.bf16.msra.mxu0 %v384
  %426 = vmatprep.subr.bf16.mxu0 0
  %427 = vmatpush1.bf16.msra.mxu0 %v385
  %428 = vmatprep.subr.bf16.mxu0 0
  %429 = vmatpush1.bf16.msra.mxu0 %v386
  %430 = vmatprep.subr.bf16.mxu0 0
  %431 = vmatpush1.bf16.msra.mxu0 %v387
  %432 = vmatprep.subr.bf16.mxu0 0
  %433 = vmatpush1.bf16.msra.mxu0 %v388
  %434 = vmatprep.subr.bf16.mxu0 0
  %435 = vmatpush1.bf16.msra.mxu0 %v389
  %436 = vmatprep.subr.bf16.mxu0 0
  %437 = vmatpush1.bf16.msra.mxu0 %v390
  %438 = vmatprep.subr.bf16.mxu0 0
  %439 = vmatpush1.bf16.msra.mxu0 %v391
  %440 = vmatprep.mubr.bf16.mxu0 %v249
  %441 = vmatmul.mubr.bf16.gmra.mrb[0].mxu0 %v248
  %v442 = vpop.f32.mrb[0].mxu0
  %v443 = vadd.f32 0.0, %v442
  %v444 = vpop.f32.mrb[0].mxu0
  %v445 = vpop.f32.mrb[0].mxu0
  %v446 = vadd.f32 0.0, %v445
  %v447 = vpop.f32.mrb[0].mxu0
  %448 = vmatprep.mubr.bf16.mxu0 %v251
  %449 = vmatmul.mubr.bf16.gmra.mrb[0].mxu0 %v250
  %v450 = vpop.f32.mrb[0].mxu0
  %v451 = vadd.f32 0.0, %v450
  %v452 = vpop.f32.mrb[0].mxu0
  %v453 = vpop.f32.mrb[0].mxu0
  %v454 = vadd.f32 0.0, %v453
  %v455 = vpop.f32.mrb[0].mxu0
  %456 = vmatprep.mubr.bf16.mxu0 %v253
  %457 = vmatmul.mubr.bf16.gmra.mrb[0].mxu0 %v252
  %v458 = vpop.f32.mrb[0].mxu0
  %v459 = vadd.f32 0.0, %v458
  %v460 = vpop.f32.mrb[0].mxu0
  %v461 = vpop.f32.mrb[0].mxu0
  %v462 = vadd.f32 0.0, %v461
  %v463 = vpop.f32.mrb[0].mxu0
  %464 = vmatprep.mubr.bf16.mxu0 %v255
  %465 = vmatmul.mubr.bf16.gmra.mrb[0].mxu0 %v254
  %v466 = vpop.f32.mrb[0].mxu0
  %v467 = vadd.f32 0.0, %v466
  %v468 = vpop.f32.mrb[0].mxu0
  %v469 = vpop.f32.mrb[0].mxu0
  %v470 = vadd.f32 0.0, %v469
  %v471 = vpop.f32.mrb[0].mxu0
  %472 = vmatprep.mubr.bf16.mxu0 %v257
  %473 = vmatmul.mubr.bf16.gmra.mrb[0].mxu0 %v256
  %v474 = vpop.f32.mrb[0].mxu0
  %v475 = vadd.f32 0.0, %v474
  %v476 = vpop.f32.mrb[0].mxu0
  %v477 = vpop.f32.mrb[0].mxu0
  %v478 = vadd.f32 0.0, %v477
  %v479 = vpop.f32.mrb[0].mxu0
  %480 = vmatprep.mubr.bf16.mxu0 %v259
  %481 = vmatmul.mubr.bf16.gmra.mrb[0].mxu0 %v258
  %v482 = vpop.f32.mrb[0].mxu0
  %v483 = vadd.f32 0.0, %v482
  %v484 = vpop.f32.mrb[0].mxu0
  %v485 = vpop.f32.mrb[0].mxu0
  %v486 = vadd.f32 0.0, %v485
  %v487 = vpop.f32.mrb[0].mxu0
  %488 = vmatprep.mubr.bf16.mxu0 %v261
  %489 = vmatmul.mubr.bf16.gmra.mrb[0].mxu0 %v260
  %v490 = vpop.f32.mrb[0].mxu0
  %v491 = vadd.f32 0.0, %v490
  %v492 = vpop.f32.mrb[0].mxu0
  %v493 = vpop.f32.mrb[0].mxu0
  %v494 = vadd.f32 0.0, %v493
  %v495 = vpop.f32.mrb[0].mxu0
  %496 = vmatprep.mubr.bf16.mxu0 %v263
  %497 = vmatmul.mubr.bf16.gmra.mrb[0].mxu0 %v262
  %v498 = vpop.f32.mrb[0].mxu0
  %v499 = vadd.f32 0.0, %v498
  %v500 = vpop.f32.mrb[0].mxu0
  %v501 = vpop.f32.mrb[0].mxu0
  %v502 = vadd.f32 0.0, %v501
  %v503 = vpop.f32.mrb[0].mxu0
  %504 = vmatprep.mubr.bf16.mxu0 %v265
  %505 = vmatmul.mubr.bf16.gmra.mrb[0].mxu0 %v264
  %v506 = vpop.f32.mrb[0].mxu0
  %v507 = vadd.f32 0.0, %v506
  %v508 = vpop.f32.mrb[0].mxu0
  %v509 = vpop.f32.mrb[0].mxu0
  %v510 = vadd.f32 0.0, %v509
  %v511 = vpop.f32.mrb[0].mxu0
  %512 = vmatprep.mubr.bf16.mxu0 %v267
  %513 = vmatmul.mubr.bf16.gmra.mrb[0].mxu0 %v266
  %v514 = vpop.f32.mrb[0].mxu0
  %v515 = vadd.f32 0.0, %v514
  %v516 = vpop.f32.mrb[0].mxu0
  %v517 = vpop.f32.mrb[0].mxu0
  %v518 = vadd.f32 0.0, %v517
  %v519 = vpop.f32.mrb[0].mxu0
  %520 = vmatprep.mubr.bf16.mxu0 %v269
  %521 = vmatmul.mubr.bf16.gmra.mrb[0].mxu0 %v268
  %v522 = vpop.f32.mrb[0].mxu0
  %v523 = vadd.f32 0.0, %v522
  %v524 = vpop.f32.mrb[0].mxu0
  %v525 = vpop.f32.mrb[0].mxu0
  %v526 = vadd.f32 0.0, %v525
  %v527 = vpop.f32.mrb[0].mxu0
  %528 = vmatprep.mubr.bf16.mxu0 %v271
  %529 = vmatmul.mubr.bf16.gmra.mrb[0].mxu0 %v270
  %v530 = vpop.f32.mrb[0].mxu0
  %v531 = vadd.f32 0.0, %v530
  %v532 = vpop.f32.mrb[0].mxu0
  %v533 = vpop.f32.mrb[0].mxu0
  %v534 = vadd.f32 0.0, %v533
  %v535 = vpop.f32.mrb[0].mxu0
  %536 = vmatprep.mubr.bf16.mxu0 %v273
  %537 = vmatmul.mubr.bf16.gmra.mrb[0].mxu0 %v272
  %v538 = vpop.f32.mrb[0].mxu0
  %v539 = vadd.f32 0.0, %v538
  %v540 = vpop.f32.mrb[0].mxu0
  %v541 = vpop.f32.mrb[0].mxu0
  %v542 = vadd.f32 0.0, %v541
  %v543 = vpop.f32.mrb[0].mxu0
  %544 = vmatprep.mubr.bf16.mxu0 %v275
  %545 = vmatmul.mubr.bf16.gmra.mrb[0].mxu0 %v274
  %v546 = vpop.f32.mrb[0].mxu0
  %v547 = vadd.f32 0.0, %v546
  %v548 = vpop.f32.mrb[0].mxu0
  %v549 = vpop.f32.mrb[0].mxu0
  %v550 = vadd.f32 0.0, %v549
  %v551 = vpop.f32.mrb[0].mxu0
  %552 = vmatprep.mubr.bf16.mxu0 %v277
  %553 = vmatmul.mubr.bf16.gmra.mrb[0].mxu0 %v276
  %v554 = vpop.f32.mrb[0].mxu0
  %v555 = vadd.f32 0.0, %v554
  %v556 = vpop.f32.mrb[0].mxu0
  %v557 = vpop.f32.mrb[0].mxu0
  %v558 = vadd.f32 0.0, %v557
  %v559 = vpop.f32.mrb[0].mxu0
  %560 = vmatprep.mubr.bf16.mxu0 %v279
  %561 = vmatmul.mubr.bf16.gmra.mrb[0].mxu0 %v278
  %v562 = vpop.f32.mrb[0].mxu0
  %v563 = vadd.f32 0.0, %v562
  %v564 = vpop.f32.mrb[0].mxu0
  %v565 = vpop.f32.mrb[0].mxu0
  %v566 = vadd.f32 0.0, %v565
  %v567 = vpop.f32.mrb[0].mxu0
  %568 = vdwg.mxu0
  %v569 = vadd.f32 %v88, %v443
  %v570 = vadd.f32 %v89, %v446
  %v571 = vadd.f32 %v90, %v451
  %v572 = vadd.f32 %v91, %v454
  %v573 = vadd.f32 %v92, %v459
  %v574 = vadd.f32 %v93, %v462
  %v575 = vadd.f32 %v94, %v467
  %v576 = vadd.f32 %v95, %v470
  %v577 = vadd.f32 %v96, %v475
  %v578 = vadd.f32 %v97, %v478
  %v579 = vadd.f32 %v98, %v483
  %v580 = vadd.f32 %v99, %v486
  %v581 = vadd.f32 %v100, %v491
  %v582 = vadd.f32 %v101, %v494
  %v583 = vadd.f32 %v102, %v499
  %v584 = vadd.f32 %v103, %v502
  %v585 = vadd.f32 %v104, %v507
  %v586 = vadd.f32 %v105, %v510
  %v587 = vadd.f32 %v106, %v515
  %v588 = vadd.f32 %v107, %v518
  %v589 = vadd.f32 %v108, %v523
  %v590 = vadd.f32 %v109, %v526
  %v591 = vadd.f32 %v110, %v531
  %v592 = vadd.f32 %v111, %v534
  %v593 = vadd.f32 %v112, %v539
  %v594 = vadd.f32 %v113, %v542
  %v595 = vadd.f32 %v114, %v547
  %v596 = vadd.f32 %v115, %v550
  %v597 = vadd.f32 %v116, %v555
  %v598 = vadd.f32 %v117, %v558
  %v599 = vadd.f32 %v118, %v563
  %v600 = vadd.f32 %v119, %v566
  %601 = vst [vmem:[#allocation2] sm:$0xff] %v569
  %602 = vst [vmem:[#allocation2 + $0x8] sm:$0xff] %v570
  %603 = vst [vmem:[#allocation2 + $0x10] sm:$0xff] %v571
  %604 = vst [vmem:[#allocation2 + $0x18] sm:$0xff] %v572
  %605 = vst [vmem:[#allocation2 + $0x20] sm:$0xff] %v573
  %606 = vst [vmem:[#allocation2 + $0x28] sm:$0xff] %v574
  %607 = vst [vmem:[#allocation2 + $0x30] sm:$0xff] %v575
  %608 = vst [vmem:[#allocation2 + $0x38] sm:$0xff] %v576
  %609 = vst [vmem:[#allocation2 + $0x40] sm:$0xff] %v577
  %610 = vst [vmem:[#allocation2 + $0x48] sm:$0xff] %v578
  %611 = vst [vmem:[#allocation2 + $0x50] sm:$0xff] %v579
  %612 = vst [vmem:[#allocation2 + $0x58] sm:$0xff] %v580
  %613 = vst [vmem:[#allocation2 + $0x60] sm:$0xff] %v581
  %614 = vst [vmem:[#allocation2 + $0x68] sm:$0xff] %v582
  %615 = vst [vmem:[#allocation2 + $0x70] sm:$0xff] %v583
  %616 = vst [vmem:[#allocation2 + $0x78] sm:$0xff] %v584
  %617 = vst [vmem:[#allocation2 + $0x80] sm:$0xff] %v585
  %618 = vst [vmem:[#allocation2 + $0x88] sm:$0xff] %v586
  %619 = vst [vmem:[#allocation2 + $0x90] sm:$0xff] %v587
  %620 = vst [vmem:[#allocation2 + $0x98] sm:$0xff] %v588
  %621 = vst [vmem:[#allocation2 + $0xa0] sm:$0xff] %v589
  %622 = vst [vmem:[#allocation2 + $0xa8] sm:$0xff] %v590
  %623 = vst [vmem:[#allocation2 + $0xb0] sm:$0xff] %v591
  %624 = vst [vmem:[#allocation2 + $0xb8] sm:$0xff] %v592
  %625 = vst [vmem:[#allocation2 + $0xc0] sm:$0xff] %v593
  %626 = vst [vmem:[#allocation2 + $0xc8] sm:$0xff] %v594
  %627 = vst [vmem:[#allocation2 + $0xd0] sm:$0xff] %v595
  %628 = vst [vmem:[#allocation2 + $0xd8] sm:$0xff] %v596
  %629 = vst [vmem:[#allocation2 + $0xe0] sm:$0xff] %v597
  %630 = vst [vmem:[#allocation2 + $0xe8] sm:$0xff] %v598
  %631 = vst [vmem:[#allocation2 + $0xf0] sm:$0xff] %v599
  %632 = vst [vmem:[#allocation2 + $0xf8] sm:$0xff] %v600
  // Predicated region
  $region18: #{gcn_layer.3} parent=0 // pred_check
    %p633 = pneg %p15
  $region19: #{gcn_layer.3} parent=0 // pred_check_branch
    %635 = sbr.rel (%p633) target = $region21
  $region20: #{gcn_layer.3} parent=0 // pred_region
    %v636 = vld [vmem:[#allocation2] sm:$0xff]
    %v637 = vld [vmem:[#allocation2 + $0x8] sm:$0xff]
    %v638 = vld [vmem:[#allocation2 + $0x10] sm:$0xff]
    %v639 = vld [vmem:[#allocation2 + $0x18] sm:$0xff]
    %v640 = vld [vmem:[#allocation2 + $0x20] sm:$0xff]
    %v641 = vld [vmem:[#allocation2 + $0x28] sm:$0xff]
    %v642 = vld [vmem:[#allocation2 + $0x30] sm:$0xff]
    %v643 = vld [vmem:[#allocation2 + $0x38] sm:$0xff]
    %v644 = vld [vmem:[#allocation2 + $0x40] sm:$0xff]
    %v645 = vld [vmem:[#allocation2 + $0x48] sm:$0xff]
    %v646 = vld [vmem:[#allocation2 + $0x50] sm:$0xff]
    %v647 = vld [vmem:[#allocation2 + $0x58] sm:$0xff]
    %v648 = vld [vmem:[#allocation2 + $0x60] sm:$0xff]
    %v649 = vld [vmem:[#allocation2 + $0x68] sm:$0xff]
    %v650 = vld [vmem:[#allocation2 + $0x70] sm:$0xff]
    %v651 = vld [vmem:[#allocation2 + $0x78] sm:$0xff]
    %v652 = vld [vmem:[#allocation2 + $0x80] sm:$0xff]
    %v653 = vld [vmem:[#allocation2 + $0x88] sm:$0xff]
    %v654 = vld [vmem:[#allocation2 + $0x90] sm:$0xff]
    %v655 = vld [vmem:[#allocation2 + $0x98] sm:$0xff]
    %v656 = vld [vmem:[#allocation2 + $0xa0] sm:$0xff]
    %v657 = vld [vmem:[#allocation2 + $0xa8] sm:$0xff]
    %v658 = vld [vmem:[#allocation2 + $0xb0] sm:$0xff]
    %v659 = vld [vmem:[#allocation2 + $0xb8] sm:$0xff]
    %v660 = vld [vmem:[#allocation2 + $0xc0] sm:$0xff]
    %v661 = vld [vmem:[#allocation2 + $0xc8] sm:$0xff]
    %v662 = vld [vmem:[#allocation2 + $0xd0] sm:$0xff]
    %v663 = vld [vmem:[#allocation2 + $0xd8] sm:$0xff]
    %v664 = vld [vmem:[#allocation2 + $0xe0] sm:$0xff]
    %v665 = vld [vmem:[#allocation2 + $0xe8] sm:$0xff]
    %v666 = vld [vmem:[#allocation2 + $0xf0] sm:$0xff]
    %v667 = vld [vmem:[#allocation2 + $0xf8] sm:$0xff]
    %v668 = vld [vmem:[%s2] sm:$0x1]
    %v670 = vlaneseq
    %v671 = vshrl.u32 %v670, 7
    %v672 = vsub.s32 0, %v671
    %v673 = vrot.slane %v668, %v672
    %v675 = vadd.f32 %v636, %v673
    %v676 = vadd.f32 %v637, %v673
    %v677 = vadd.f32 %v638, %v673
    %v678 = vadd.f32 %v639, %v673
    %v679 = vadd.f32 %v640, %v673
    %v680 = vadd.f32 %v641, %v673
    %v681 = vadd.f32 %v642, %v673
    %v682 = vadd.f32 %v643, %v673
    %v683 = vadd.f32 %v644, %v673
    %v684 = vadd.f32 %v645, %v673
    %v685 = vadd.f32 %v646, %v673
    %v686 = vadd.f32 %v647, %v673
    %v687 = vadd.f32 %v648, %v673
    %v688 = vadd.f32 %v649, %v673
    %v689 = vadd.f32 %v650, %v673
    %v690 = vadd.f32 %v651, %v673
    %v691 = vadd.f32 %v652, %v673
    %v692 = vadd.f32 %v653, %v673
    %v693 = vadd.f32 %v654, %v673
    %v694 = vadd.f32 %v655, %v673
    %v695 = vadd.f32 %v656, %v673
    %v696 = vadd.f32 %v657, %v673
    %v697 = vadd.f32 %v658, %v673
    %v698 = vadd.f32 %v659, %v673
    %v699 = vadd.f32 %v660, %v673
    %v700 = vadd.f32 %v661, %v673
    %v701 = vadd.f32 %v662, %v673
    %v702 = vadd.f32 %v663, %v673
    %v703 = vadd.f32 %v664, %v673
    %v704 = vadd.f32 %v665, %v673
    %v705 = vadd.f32 %v666, %v673
    %v706 = vadd.f32 %v667, %v673
    %v707 = vpack.c.bf16 %v676, %v675
    %v708 = vpack.c.bf16 %v678, %v677
    %v709 = vpack.c.bf16 %v680, %v679
    %v710 = vpack.c.bf16 %v682, %v681
    %v711 = vpack.c.bf16 %v684, %v683
    %v712 = vpack.c.bf16 %v686, %v685
    %v713 = vpack.c.bf16 %v688, %v687
    %v714 = vpack.c.bf16 %v690, %v689
    %v715 = vpack.c.bf16 %v692, %v691
    %v716 = vpack.c.bf16 %v694, %v693
    %v717 = vpack.c.bf16 %v696, %v695
    %v718 = vpack.c.bf16 %v698, %v697
    %v719 = vpack.c.bf16 %v700, %v699
    %v720 = vpack.c.bf16 %v702, %v701
    %v721 = vpack.c.bf16 %v704, %v703
    %v722 = vpack.c.bf16 %v706, %v705
    %v739 = vunpack.c.l.b16 %v707
    %v740 = vunpack.c.h.b16 %v707
    %v741 = vunpack.c.l.b16 %v708
    %v742 = vunpack.c.h.b16 %v708
    %v743 = vunpack.c.l.b16 %v709
    %v744 = vunpack.c.h.b16 %v709
    %v745 = vunpack.c.l.b16 %v710
    %v746 = vunpack.c.h.b16 %v710
    %v747 = vunpack.c.l.b16 %v711
    %v748 = vunpack.c.h.b16 %v711
    %v749 = vunpack.c.l.b16 %v712
    %v750 = vunpack.c.h.b16 %v712
    %v751 = vunpack.c.l.b16 %v713
    %v752 = vunpack.c.h.b16 %v713
    %v753 = vunpack.c.l.b16 %v714
    %v754 = vunpack.c.h.b16 %v714
    %v755 = vunpack.c.l.b16 %v715
    %v756 = vunpack.c.h.b16 %v715
    %v757 = vunpack.c.l.b16 %v716
    %v758 = vunpack.c.h.b16 %v716
    %v759 = vunpack.c.l.b16 %v717
    %v760 = vunpack.c.h.b16 %v717
    %v761 = vunpack.c.l.b16 %v718
    %v762 = vunpack.c.h.b16 %v718
    %v763 = vunpack.c.l.b16 %v719
    %v764 = vunpack.c.h.b16 %v719
    %v765 = vunpack.c.l.b16 %v720
    %v766 = vunpack.c.h.b16 %v720
    %v767 = vunpack.c.l.b16 %v721
    %v768 = vunpack.c.h.b16 %v721
    %v769 = vunpack.c.l.b16 %v722
    %v770 = vunpack.c.h.b16 %v722
    %v771 = vpack.c.b16 %v739, %v739
    %v772 = vpack.c.b16 %v740, %v740
    %v773 = vpack.c.b16 %v741, %v741
    %v774 = vpack.c.b16 %v742, %v742
    %v775 = vpack.c.b16 %v743, %v743
    %v776 = vpack.c.b16 %v744, %v744
    %v777 = vpack.c.b16 %v745, %v745
    %v778 = vpack.c.b16 %v746, %v746
    %v779 = vpack.c.b16 %v747, %v747
    %v780 = vpack.c.b16 %v748, %v748
    %v781 = vpack.c.b16 %v749, %v749
    %v782 = vpack.c.b16 %v750, %v750
    %v783 = vpack.c.b16 %v751, %v751
    %v784 = vpack.c.b16 %v752, %v752
    %v785 = vpack.c.b16 %v753, %v753
    %v786 = vpack.c.b16 %v754, %v754
    %v787 = vpack.c.b16 %v755, %v755
    %v788 = vpack.c.b16 %v756, %v756
    %v789 = vpack.c.b16 %v757, %v757
    %v790 = vpack.c.b16 %v758, %v758
    %v791 = vpack.c.b16 %v759, %v759
    %v792 = vpack.c.b16 %v760, %v760
    %v793 = vpack.c.b16 %v761, %v761
    %v794 = vpack.c.b16 %v762, %v762
    %v795 = vpack.c.b16 %v763, %v763
    %v796 = vpack.c.b16 %v764, %v764
    %v797 = vpack.c.b16 %v765, %v765
    %v798 = vpack.c.b16 %v766, %v766
    %v799 = vpack.c.b16 %v767, %v767
    %v800 = vpack.c.b16 %v768, %v768
    %v801 = vpack.c.b16 %v769, %v769
    %v802 = vpack.c.b16 %v770, %v770
    %835 = vst [vmem:[%s3] sm:$0xf] %v771
    %836 = vst [vmem:[%s3 + $0x4] sm:$0xf] %v772
    %837 = vst [vmem:[%s3 + $0x8] sm:$0xf] %v773
    %838 = vst [vmem:[%s3 + $0xc] sm:$0xf] %v774
    %839 = vst [vmem:[%s3 + $0x10] sm:$0xf] %v775
    %840 = vst [vmem:[%s3 + $0x14] sm:$0xf] %v776
    %841 = vst [vmem:[%s3 + $0x18] sm:$0xf] %v777
    %842 = vst [vmem:[%s3 + $0x1c] sm:$0xf] %v778
    %843 = vst [vmem:[%s3 + $0x20] sm:$0xf] %v779
    %844 = vst [vmem:[%s3 + $0x24] sm:$0xf] %v780
    %845 = vst [vmem:[%s3 + $0x28] sm:$0xf] %v781
    %846 = vst [vmem:[%s3 + $0x2c] sm:$0xf] %v782
    %847 = vst [vmem:[%s3 + $0x30] sm:$0xf] %v783
    %848 = vst [vmem:[%s3 + $0x34] sm:$0xf] %v784
    %849 = vst [vmem:[%s3 + $0x38] sm:$0xf] %v785
    %850 = vst [vmem:[%s3 + $0x3c] sm:$0xf] %v786
    %851 = vst [vmem:[%s3 + $0x40] sm:$0xf] %v787
    %852 = vst [vmem:[%s3 + $0x44] sm:$0xf] %v788
    %853 = vst [vmem:[%s3 + $0x48] sm:$0xf] %v789
    %854 = vst [vmem:[%s3 + $0x4c] sm:$0xf] %v790
    %855 = vst [vmem:[%s3 + $0x50] sm:$0xf] %v791
    %856 = vst [vmem:[%s3 + $0x54] sm:$0xf] %v792
    %857 = vst [vmem:[%s3 + $0x58] sm:$0xf] %v793
    %858 = vst [vmem:[%s3 + $0x5c] sm:$0xf] %v794
    %859 = vst [vmem:[%s3 + $0x60] sm:$0xf] %v795
    %860 = vst [vmem:[%s3 + $0x64] sm:$0xf] %v796
    %861 = vst [vmem:[%s3 + $0x68] sm:$0xf] %v797
    %862 = vst [vmem:[%s3 + $0x6c] sm:$0xf] %v798
    %863 = vst [vmem:[%s3 + $0x70] sm:$0xf] %v799
    %864 = vst [vmem:[%s3 + $0x74] sm:$0xf] %v800
    %865 = vst [vmem:[%s3 + $0x78] sm:$0xf] %v801
    %866 = vst [vmem:[%s3 + $0x7c] sm:$0xf] %v802
  $region21: #{gcn_layer.3} parent=0 // pred_fallthru
    _
  // Predicated region
  $region22: #{gcn_layer.3} parent=0 // pred_check
    _
  $region23: #{gcn_layer.3} parent=0 // pred_check_branch
    %868 = sbr.rel (0) target = $region25
  $region24: #{gcn_layer.3} parent=0 // pred_region
    _
  $region25: #{gcn_layer.3} parent=0 // pred_fallthru
    _
  // Predicated region
  $region26: #{gcn_layer.3} parent=0 // pred_check
    _
  $region27: #{gcn_layer.3} parent=0 // pred_check_branch
    %870 = sbr.rel (0) target = $region29
  $region28: #{gcn_layer.3} parent=0 // pred_region
    _
  $region29: #{gcn_layer.3} parent=0 // pred_fallthru
    _

</llo_original>
